<compile_context>
chip_gen: v5e
topology: v5e:2x2
jax: 0.10.0
libtpu: 0.0.40
codegen_flags: <defaults>
</compile_context>

<pallas_src>
import functools

import jax
import jax.numpy as jnp
from jax import lax
from jax.experimental import pallas as pl
from jax.experimental.pallas import tpu as pltpu

_EPS = 1e-5
# Neighbor order produced by F.unfold(kernel_size=3) with the center (index 4) removed.
_NEIGHBOR_OFFSETS = [(-1, -1), (-1, 0), (-1, 1), (0, -1),
                     (0, 1), (1, -1), (1, 0), (1, 1)]


def _round_up(v, m):
    return ((v + m - 1) // m) * m


def _dense_layer_kernel(Bt, H, W, Cin_p, Cout_p, dilation, use_pdc,
                        x_ref, masks_ref, scale_ref, shift_ref, w_ref, bias_ref,
                        o_ref):
    """BN(inference)+ReLU + 3x3 conv / PDC + fused channel concat for Bt images."""
    f32 = jnp.float32
    HW = H * W
    d = dilation

    scale = scale_ref[...]                 # (Cin_p, 1)
    shift = shift_ref[...]                 # (Cin_p, 1)
    masks = masks_ref[...]                 # conv: (9, HW) 0/1 ; PDC: (4, HW) border flags
    w = w_ref[...]                         # (Cout_p, 9*Cin_p) bf16 (merged taps)

    for img in range(Bt):                  # static small loop: images per grid step
        x = x_ref[img]                                           # (Cin_p, HW) f32
        y = jnp.maximum(x * scale + shift, 0.0)                  # folded BN + ReLU

        # 8 shared lane rotations: rolled[(a,b)][:, r] == y[:, (r + a*W + b) mod HW]
        rolled = {(0, 0): y}
        for a in (-d, 0, d):
            for b in (-d, 0, d):
                if (a, b) != (0, 0):
                    rolled[(a, b)] = pltpu.roll(y, shift=(-(a * W + b)) % HW, axis=1)

        taps = []
        if not use_pdc:
            # standard 3x3 dilated conv, zero padding = dilation:
            # each rolled plane is multiplied by its precomputed 0/1 border mask row.
            t = 0
            for i in range(3):
                for j in range(3):
                    dh, dw = (i - 1) * d, (j - 1) * d
                    taps.append(rolled[(dh, dw)] * masks[t:t + 1, :])
                    t += 1
        else:
            # PixelDifferenceConvolution (kernel 3, reflect padding 1).
            # Taps 0..7 are the reflect-shifted neighbor planes; tap 8 is y itself,
            # whose weight -(sum_n W_n) was merged into w in the wrapper.
            row_lo = masks[0:1, :] > 0.5
            row_hi = masks[1:2, :] > 0.5
            col_lo = masks[2:3, :] > 0.5
            col_hi = masks[3:4, :] > 0.5
            for dh, dw in _NEIGHBOR_OFFSETS:
                base = rolled[(dh, dw)]
                if dh != 0 and dw != 0:
                    rflip = row_hi if dh > 0 else row_lo
                    cflip = col_hi if dw > 0 else col_lo
                    p = jnp.where(jnp.logical_and(rflip, cflip), rolled[(-dh, -dw)],
                        jnp.where(rflip, rolled[(-dh, dw)],
                        jnp.where(cflip, rolled[(dh, -dw)], base)))
                elif dh != 0:
                    rflip = row_hi if dh > 0 else row_lo
                    p = jnp.where(rflip, rolled[(-dh, dw)], base)
                else:
                    cflip = col_hi if dw > 0 else col_lo
                    p = jnp.where(cflip, rolled[(dh, -dw)], base)
                taps.append(p)
            taps.append(y)

        # One merged MXU matmul: (Cout_p, 9*Cin_p) @ (9*Cin_p, HW), f32 accumulate.
        stacked = jnp.concatenate(taps, axis=0).astype(jnp.bfloat16)
        acc = jnp.dot(w, stacked, preferred_element_type=f32)      # (Cout_p, HW)
        if use_pdc:
            acc = acc + bias_ref[...]

        # fused torch.cat([x, new_features], dim=1): single aligned full-block store,
        # reusing the already-loaded x for the passthrough rows.
        o_ref[img] = jnp.concatenate([x, acc], axis=0).astype(o_ref.dtype)


def _pick_block_batch(B, bytes_per_image):
    """Images per grid step: fill VMEM, keep >=2 grid iterations when B >= 2 (v7x 2 TCs)."""
    budget = 20 * 1024 * 1024
    bt = max(1, min(B, budget // max(bytes_per_image, 1)))
    if B >= 2:
        bt = min(bt, max(1, B // 2))
    while B % bt != 0:
        bt -= 1
    return bt


def dense_layer_forward(x, params, *, growth_rate, dilation=1, use_pdc=False):
    """Forward of _DenseLayer.  x: (B, Cin, H, W) float32 NCHW."""
    B, Cin, H, W = x.shape
    HW = H * W
    Cout = growth_rate
    Cin_p = _round_up(Cin, 8)            # sublane-align channel dims
    Cout_p = _round_up(Cout, 8)
    pad_c = Cin_p - Cin
    ntap = 9
    d = dilation

    if use_pdc and dilation != 1:
        # TODO(synk): PDC with padding=dilation>1 changes the spatial size and needs the
        # bilinear F.interpolate branch; not implemented in the Pallas path.
        raise NotImplementedError("use_pdc=True requires dilation == 1")
    # TODO(synk): if H*W is not a multiple of 128 for real workloads, pad the lane axis
    # in the wrapper so stores stay lane-dense (re-verify masks against the reference).
    # TODO(synk): for large feature maps, additionally tile over H-strips (with a
    # dilation-row halo) sized for v7x's 64 MiB VMEM; also gives B=1 a parallel axis.

    gamma, beta, mean, var = params["bn"]
    scale = gamma / jnp.sqrt(var + _EPS)          # inference BatchNorm, folded
    shift = beta - mean * scale
    scale_p = jnp.pad(scale, (0, pad_c)).reshape(Cin_p, 1)
    shift_p = jnp.pad(shift, (0, pad_c)).reshape(Cin_p, 1)
    x_p = jnp.pad(x.reshape(B, Cin, HW), ((0, 0), (0, pad_c), (0, 0)))

    # Precomputed border masks (keeps integer div/mod and compares off the kernel VPU).
    lane = jnp.arange(HW, dtype=jnp.int32)
    hh = lane // W
    ww = lane % W
    if not use_pdc:
        rows = []
        for i in range(3):
            for j in range(3):
                dh, dw = (i - 1) * d, (j - 1) * d
                m = jnp.ones((HW,), jnp.float32)
                if dh > 0:
                    m = m * (hh < H - dh)
                if dh < 0:
                    m = m * (hh >= -dh)
                if dw > 0:
                    m = m * (ww < W - dw)
                if dw < 0:
                    m = m * (ww >= -dw)
                rows.append(m)
        masks = jnp.stack(rows, axis=0)                                   # (9, HW)
    else:
        masks = jnp.stack([hh == 0, hh == H - 1, ww == 0, ww == W - 1],
                          axis=0).astype(jnp.float32)                     # (4, HW)

    # Merged, bf16 weights: (Cout_p, 9*Cin_p); tap order matches the kernel.
    if use_pdc:
        w, bias = params["conv"]                              # (Cout, Cin*8), (Cout,)
        w_n = w.reshape(Cout, Cin, 8).transpose(2, 0, 1)      # (8, Cout, Cin)
        w_all = jnp.concatenate([w_n, -jnp.sum(w_n, axis=0, keepdims=True)], axis=0)
        bias_p = jnp.pad(bias, (0, Cout_p - Cout)).reshape(Cout_p, 1)
    else:
        (w,) = params["conv"]                                 # (Cout, Cin, 3, 3)
        w_all = jnp.transpose(w, (2, 3, 0, 1)).reshape(9, Cout, Cin)
        bias_p = jnp.zeros((Cout_p, 1), jnp.float32)
    w_all = jnp.pad(w_all, ((0, 0), (0, Cout_p - Cout), (0, pad_c)))      # (9, Cout_p, Cin_p)
    w_merged = (jnp.transpose(w_all, (1, 0, 2))
                .reshape(Cout_p, ntap * Cin_p).astype(jnp.bfloat16))

    # VMEM budget: in/out blocks (double-buffered) + rolled/stacked/acc temporaries.
    per_image_bytes = 4 * HW * (2 * Cin_p + 2 * (Cin_p + Cout_p)
                                + 2 * ntap * Cin_p + Cout_p)
    Bt = _pick_block_batch(B, per_image_bytes)
    n_blocks = B // Bt
    fixed_bytes = 2 * (masks.size * 4 + 2 * Cin_p * 4 + Cout_p * 4 + w_merged.size * 2)
    vmem_limit = int(min(64 * 1024 * 1024,
                         max(16 * 1024 * 1024, 2 * (Bt * per_image_bytes + fixed_bytes))))

    cost = pl.CostEstimate(
        flops=2 * B * Cout * ntap * Cin * HW,
        transcendentals=0,
        bytes_accessed=int(x_p.size * 4 + B * (Cin_p + Cout_p) * HW * 4
                           + w_merged.size * 2 + masks.size * 4))

    kernel = functools.partial(_dense_layer_kernel, Bt, H, W, Cin_p, Cout_p,
                               dilation, use_pdc)
    mask_rows = int(masks.shape[0])

    out = pl.pallas_call(
        kernel,
        grid=(n_blocks,),
        in_specs=[
            pl.BlockSpec((Bt, Cin_p, HW), lambda g: (g, 0, 0)),
            pl.BlockSpec((mask_rows, HW), lambda g: (0, 0)),
            pl.BlockSpec((Cin_p, 1), lambda g: (0, 0)),
            pl.BlockSpec((Cin_p, 1), lambda g: (0, 0)),
            pl.BlockSpec((Cout_p, ntap * Cin_p), lambda g: (0, 0)),
            pl.BlockSpec((Cout_p, 1), lambda g: (0, 0)),
        ],
        out_specs=pl.BlockSpec((Bt, Cin_p + Cout_p, HW), lambda g: (g, 0, 0)),
        out_shape=jax.ShapeDtypeStruct((B, Cin_p + Cout_p, HW), jnp.float32),
        compiler_params=pltpu.CompilerParams(
            dimension_semantics=("parallel",),       # image blocks are independent
            vmem_limit_bytes=vmem_limit),
        cost_estimate=cost,
    )(x_p, masks, scale_p, shift_p, w_merged, bias_p)

    out = out.reshape(B, Cin_p + Cout_p, H, W)
    if pad_c == 0 and Cout_p == Cout:
        return out
    return jnp.concatenate([out[:, :Cin], out[:, Cin_p:Cin_p + Cout]], axis=1)


# ---------------------------------------------------------------------------
# Deterministic parameter init (PyTorch parameter layouts).
# ---------------------------------------------------------------------------
def init_params(key, in_channels, growth_rate, use_pdc):
    k = jax.random.split(key, 6)
    gamma = 1.0 + 0.1 * jax.random.normal(k[0], (in_channels,), jnp.float32)
    beta = 0.1 * jax.random.normal(k[1], (in_channels,), jnp.float32)
    mean = 0.1 * jax.random.normal(k[2], (in_channels,), jnp.float32)
    var = 1.0 + 0.1 * jnp.abs(jax.random.normal(k[3], (in_channels,), jnp.float32))
    if use_pdc:
        fan = in_channels * 8
        w = jax.random.normal(k[4], (growth_rate, fan), jnp.float32) * (2.0 / fan) ** 0.5
        bias = 0.05 * jax.random.normal(k[5], (growth_rate,), jnp.float32)
        conv = (w, bias)
    else:
        w = jax.random.normal(k[4], (growth_rate, in_channels, 3, 3), jnp.float32) \
            * (1.0 / (9.0 * in_channels)) ** 0.5
        conv = (w,)
    return {"bn": (gamma, beta, mean, var), "conv": conv}


# ---------------------------------------------------------------------------
# Pure-JAX reference (PyTorch semantics: BN eval -> ReLU -> conv/PDC -> concat).
# ---------------------------------------------------------------------------
def _ref_forward(x, params, *, growth_rate, dilation=1, use_pdc=False):
    gamma, beta, mean, var = params["bn"]
    y = (x - mean[None, :, None, None]) * (
        gamma[None, :, None, None] / jnp.sqrt(var[None, :, None, None] + _EPS)
    ) + beta[None, :, None, None]
    y = jnp.maximum(y, 0.0)
    if use_pdc:
        w, bias = params["conv"]
        B, C, H, W = y.shape
        yp = jnp.pad(y, ((0, 0), (0, 0), (1, 1), (1, 1)), mode="reflect")
        pats = [yp[:, :, i:i + H, j:j + W] for i in range(3) for j in range(3)]
        pats = jnp.stack(pats, axis=2)                       # (B, C, 9, H, W)
        center = pats[:, :, 4:5]
        neigh = jnp.concatenate([pats[:, :, :4], pats[:, :, 5:]], axis=2)
        diffs = (neigh - center).reshape(B, C * 8, H * W)
        nf = (jnp.einsum("ok,bkl->bol", w, diffs)
              + bias[None, :, None]).reshape(B, growth_rate, H, W)
    else:
        (w,) = params["conv"]
        nf = lax.conv_general_dilated(
            y, w, window_strides=(1, 1),
            padding=((dilation, dilation), (dilation, dilation)),
            rhs_dilation=(dilation, dilation),
            dimension_numbers=("NCHW", "OIHW", "NCHW"))
    # For all supported configs the conv output keeps (H, W), so the
    # F.interpolate branch of the PyTorch module is never taken.
    return jnp.concatenate([x, nf], axis=1)


if __name__ == "__main__":
    key = jax.random.PRNGKey(0)
    H, W = 16, 16
    configs = [
        dict(B=2, in_channels=4,  growth_rate=32, dilation=1, use_pdc=False),
        dict(B=2, in_channels=8,  growth_rate=32, dilation=2, use_pdc=False),
        dict(B=4, in_channels=16, growth_rate=32, dilation=1, use_pdc=False),
        dict(B=4, in_channels=4,  growth_rate=32, dilation=1, use_pdc=True),
    ]
    for i, cfg in enumerate(configs):
        kx, kp = jax.random.split(jax.random.fold_in(key, i))
        Cin = cfg["in_channels"]
        x = jax.random.normal(kx, (cfg["B"], Cin, H, W), jnp.float32)
        params = init_params(kp, Cin, cfg["growth_rate"], cfg["use_pdc"])

        out = dense_layer_forward(x, params, growth_rate=cfg["growth_rate"],
                                  dilation=cfg["dilation"], use_pdc=cfg["use_pdc"])
        out = jax.block_until_ready(out)

        ref = _ref_forward(x, params, growth_rate=cfg["growth_rate"],
                           dilation=cfg["dilation"], use_pdc=cfg["use_pdc"])
        assert out.shape == ref.shape, (out.shape, ref.shape)
        # The concat passthrough is copied in f32 and must be bit-exact.
        assert bool(jnp.array_equal(out[:, :Cin], x)), f"config {cfg}: passthrough mismatch"
        # New features use bf16 MXU operands with f32 accumulation -> loose tolerance.
        err = jnp.abs(out[:, Cin:] - ref[:, Cin:])
        max_err, mean_err = float(jnp.max(err)), float(jnp.mean(err))
        assert max_err < 6e-2 and mean_err < 1e-2, \
            f"config {cfg}: max abs error {max_err}, mean abs error {mean_err}"

    print("KERNEL_OK")
</pallas_src>

<mosaic_0001>
module attributes {stable_mosaic.version = 11 : i64} {
  func.func @_dense_layer_kernel(%arg0: i32, %arg1: memref<1x8x256xf32, #tpu.memory_space<vmem>>, %arg2: memref<9x256xf32, #tpu.memory_space<vmem>>, %arg3: memref<8x1xf32, #tpu.memory_space<vmem>>, %arg4: memref<8x1xf32, #tpu.memory_space<vmem>>, %arg5: memref<32x72xbf16, #tpu.memory_space<vmem>>, %arg6: memref<32x1xf32, #tpu.memory_space<vmem>>, %arg7: memref<1x40x256xf32, #tpu.memory_space<vmem>>) attributes {dimension_semantics = [#tpu.dimension_semantics<parallel>], iteration_bounds = array<i64: 2>, scalar_prefetch = 0 : i64, scratch_operands = 0 : i64, tpu.core_type = #tpu.core_type<tc>, window_params = [{transform_indices = @transform_0, window_bounds = array<i64: 1, 8, 256>}, {pipeline_mode = #tpu.pipeline_mode<synchronous>, transform_indices = @transform_1, window_bounds = array<i64: 9, 256>}, {pipeline_mode = #tpu.pipeline_mode<synchronous>, transform_indices = @transform_2, window_bounds = array<i64: 8, 1>}, {pipeline_mode = #tpu.pipeline_mode<synchronous>, transform_indices = @transform_3, window_bounds = array<i64: 8, 1>}, {pipeline_mode = #tpu.pipeline_mode<synchronous>, transform_indices = @transform_4, window_bounds = array<i64: 32, 72>}, {pipeline_mode = #tpu.pipeline_mode<synchronous>, transform_indices = @transform_5, window_bounds = array<i64: 32, 1>}, {transform_indices = @transform_6, window_bounds = array<i64: 1, 40, 256>}]} {
    %c0 = arith.constant 0 : index
    %c0_0 = arith.constant 0 : index
    %0 = vector.load %arg3[%c0, %c0_0] : memref<8x1xf32, #tpu.memory_space<vmem>>, vector<8x1xf32>
    %c0_1 = arith.constant 0 : index
    %c0_2 = arith.constant 0 : index
    %1 = vector.load %arg4[%c0_1, %c0_2] : memref<8x1xf32, #tpu.memory_space<vmem>>, vector<8x1xf32>
    %c0_3 = arith.constant 0 : index
    %c0_4 = arith.constant 0 : index
    %2 = vector.load %arg2[%c0_3, %c0_4] : memref<9x256xf32, #tpu.memory_space<vmem>>, vector<9x256xf32>
    %c0_5 = arith.constant 0 : index
    %c0_6 = arith.constant 0 : index
    %3 = vector.load %arg5[%c0_5, %c0_6] : memref<32x72xbf16, #tpu.memory_space<vmem>>, vector<32x72xbf16>
    %c0_7 = arith.constant 0 : index
    %c0_8 = arith.constant 0 : index
    %c0_9 = arith.constant 0 : index
    %4 = vector.load %arg1[%c0_7, %c0_8, %c0_9] : memref<1x8x256xf32, #tpu.memory_space<vmem>>, vector<1x8x256xf32>
    %5 = vector.shape_cast %4 : vector<1x8x256xf32> to vector<8x256xf32>
    %6 = vector.broadcast %0 : vector<8x1xf32> to vector<8x256xf32>
    %7 = arith.mulf %5, %6 : vector<8x256xf32>
    %8 = vector.broadcast %1 : vector<8x1xf32> to vector<8x256xf32>
    %9 = arith.addf %7, %8 : vector<8x256xf32>
    %cst = arith.constant 0.000000e+00 : f32
    %10 = vector.broadcast %cst : f32 to vector<8x256xf32>
    %11 = arith.maximumf %9, %10 : vector<8x256xf32>
    %c17_i32 = arith.constant 17 : i32
    %12 = tpu.dynamic_rotate %11 by %c17_i32 dim 1 : vector<8x256xf32>, i32 -> vector<8x256xf32>
    %c16_i32 = arith.constant 16 : i32
    %13 = tpu.dynamic_rotate %11 by %c16_i32 dim 1 : vector<8x256xf32>, i32 -> vector<8x256xf32>
    %c15_i32 = arith.constant 15 : i32
    %14 = tpu.dynamic_rotate %11 by %c15_i32 dim 1 : vector<8x256xf32>, i32 -> vector<8x256xf32>
    %c1_i32 = arith.constant 1 : i32
    %15 = tpu.dynamic_rotate %11 by %c1_i32 dim 1 : vector<8x256xf32>, i32 -> vector<8x256xf32>
    %c255_i32 = arith.constant 255 : i32
    %16 = tpu.dynamic_rotate %11 by %c255_i32 dim 1 : vector<8x256xf32>, i32 -> vector<8x256xf32>
    %c241_i32 = arith.constant 241 : i32
    %17 = tpu.dynamic_rotate %11 by %c241_i32 dim 1 : vector<8x256xf32>, i32 -> vector<8x256xf32>
    %c240_i32 = arith.constant 240 : i32
    %18 = tpu.dynamic_rotate %11 by %c240_i32 dim 1 : vector<8x256xf32>, i32 -> vector<8x256xf32>
    %c239_i32 = arith.constant 239 : i32
    %19 = tpu.dynamic_rotate %11 by %c239_i32 dim 1 : vector<8x256xf32>, i32 -> vector<8x256xf32>
    %20 = vector.extract_strided_slice %2 {offsets = [0, 0], sizes = [1, 256], strides = [1, 1]} : vector<9x256xf32> to vector<1x256xf32>
    %21 = vector.broadcast %20 : vector<1x256xf32> to vector<8x256xf32>
    %22 = arith.mulf %12, %21 : vector<8x256xf32>
    %23 = vector.extract_strided_slice %2 {offsets = [1, 0], sizes = [1, 256], strides = [1, 1]} : vector<9x256xf32> to vector<1x256xf32>
    %24 = vector.broadcast %23 : vector<1x256xf32> to vector<8x256xf32>
    %25 = arith.mulf %13, %24 : vector<8x256xf32>
    %26 = vector.extract_strided_slice %2 {offsets = [2, 0], sizes = [1, 256], strides = [1, 1]} : vector<9x256xf32> to vector<1x256xf32>
    %27 = vector.broadcast %26 : vector<1x256xf32> to vector<8x256xf32>
    %28 = arith.mulf %14, %27 : vector<8x256xf32>
    %29 = vector.extract_strided_slice %2 {offsets = [3, 0], sizes = [1, 256], strides = [1, 1]} : vector<9x256xf32> to vector<1x256xf32>
    %30 = vector.broadcast %29 : vector<1x256xf32> to vector<8x256xf32>
    %31 = arith.mulf %15, %30 : vector<8x256xf32>
    %32 = vector.extract_strided_slice %2 {offsets = [4, 0], sizes = [1, 256], strides = [1, 1]} : vector<9x256xf32> to vector<1x256xf32>
    %33 = vector.broadcast %32 : vector<1x256xf32> to vector<8x256xf32>
    %34 = arith.mulf %11, %33 : vector<8x256xf32>
    %35 = vector.extract_strided_slice %2 {offsets = [5, 0], sizes = [1, 256], strides = [1, 1]} : vector<9x256xf32> to vector<1x256xf32>
    %36 = vector.broadcast %35 : vector<1x256xf32> to vector<8x256xf32>
    %37 = arith.mulf %16, %36 : vector<8x256xf32>
    %38 = vector.extract_strided_slice %2 {offsets = [6, 0], sizes = [1, 256], strides = [1, 1]} : vector<9x256xf32> to vector<1x256xf32>
    %39 = vector.broadcast %38 : vector<1x256xf32> to vector<8x256xf32>
    %40 = arith.mulf %17, %39 : vector<8x256xf32>
    %41 = vector.extract_strided_slice %2 {offsets = [7, 0], sizes = [1, 256], strides = [1, 1]} : vector<9x256xf32> to vector<1x256xf32>
    %42 = vector.broadcast %41 : vector<1x256xf32> to vector<8x256xf32>
    %43 = arith.mulf %18, %42 : vector<8x256xf32>
    %44 = vector.extract_strided_slice %2 {offsets = [8, 0], sizes = [1, 256], strides = [1, 1]} : vector<9x256xf32> to vector<1x256xf32>
    %45 = vector.broadcast %44 : vector<1x256xf32> to vector<8x256xf32>
    %46 = arith.mulf %19, %45 : vector<8x256xf32>
    %47 = tpu.concatenate %22, %25, %28, %31, %34, %37, %40, %43, %46 in 0 : vector<8x256xf32>, vector<8x256xf32>, vector<8x256xf32>, vector<8x256xf32>, vector<8x256xf32>, vector<8x256xf32>, vector<8x256xf32>, vector<8x256xf32>, vector<8x256xf32> -> vector<72x256xf32>
    %48 = arith.truncf %47 : vector<72x256xf32> to vector<72x256xbf16>
    %cst_10 = arith.constant dense<0.000000e+00> : vector<32x256xf32>
    %49 = tpu.matmul %3, %48, %cst_10 {dimension_numbers = #tpu.dot_dimension_numbers<[1], [0], [0], [1], [0, 0, 1, 1], [], []>} : vector<32x72xbf16>, vector<72x256xbf16>, vector<32x256xf32> -> vector<32x256xf32>
    %50 = tpu.concatenate %5, %49 in 0 : vector<8x256xf32>, vector<32x256xf32> -> vector<40x256xf32>
    %c0_11 = arith.constant 0 : index
    %c0_12 = arith.constant 0 : index
    %c0_13 = arith.constant 0 : index
    %51 = vector.load %arg7[%c0_11, %c0_12, %c0_13] : memref<1x40x256xf32, #tpu.memory_space<vmem>>, vector<1x40x256xf32>
    %52 = vector.shape_cast %51 : vector<1x40x256xf32> to vector<40x256xf32>
    %53 = vector.shape_cast %50 : vector<40x256xf32> to vector<1x40x256xf32>
    tpu.vector_store %arg7[%c0_11, %c0_12, %c0_13], %53 {strides = array<i32>} : memref<1x40x256xf32, #tpu.memory_space<vmem>>, vector<1x40x256xf32>,
    return
  }
  func.func @transform_0(%arg0: i32) -> (i32, i32, i32) {
    %c0_i32 = arith.constant 0 : i32
    %c0_i32_0 = arith.constant 0 : i32
    %c0_i32_1 = arith.constant 0 : i32
    return %arg0, %c0_i32, %c0_i32_0 : i32, i32, i32
  }
  func.func @transform_1(%arg0: i32) -> (i32, i32) {
    %c0_i32 = arith.constant 0 : i32
    %c0_i32_0 = arith.constant 0 : i32
    %c0_i32_1 = arith.constant 0 : i32
    return %c0_i32, %c0_i32_0 : i32, i32
  }
  func.func @transform_2(%arg0: i32) -> (i32, i32) {
    %c0_i32 = arith.constant 0 : i32
    %c0_i32_0 = arith.constant 0 : i32
    %c0_i32_1 = arith.constant 0 : i32
    return %c0_i32, %c0_i32_0 : i32, i32
  }
  func.func @transform_3(%arg0: i32) -> (i32, i32) {
    %c0_i32 = arith.constant 0 : i32
    %c0_i32_0 = arith.constant 0 : i32
    %c0_i32_1 = arith.constant 0 : i32
    return %c0_i32, %c0_i32_0 : i32, i32
  }
  func.func @transform_4(%arg0: i32) -> (i32, i32) {
    %c0_i32 = arith.constant 0 : i32
    %c0_i32_0 = arith.constant 0 : i32
    %c0_i32_1 = arith.constant 0 : i32
    return %c0_i32, %c0_i32_0 : i32, i32
  }
  func.func @transform_5(%arg0: i32) -> (i32, i32) {
    %c0_i32 = arith.constant 0 : i32
    %c0_i32_0 = arith.constant 0 : i32
    %c0_i32_1 = arith.constant 0 : i32
    return %c0_i32, %c0_i32_0 : i32, i32
  }
  func.func @transform_6(%arg0: i32) -> (i32, i32, i32) {
    %c0_i32 = arith.constant 0 : i32
    %c0_i32_0 = arith.constant 0 : i32
    %c0_i32_1 = arith.constant 0 : i32
    return %arg0, %c0_i32, %c0_i32_0 : i32, i32, i32
  }
}

</mosaic_0001>

<llo_original>
// kernel: tpu_custom_call.1
$region0: #{tpu_custom_call.1}
  #allocation0 [shape = 'u32[]', space=smem, size = 0x4, offset = 0x4, fixed_abs, tag = 'smem constant byte address 0x4 - core index']
  #allocation1 [shape = 'u32[72,128]{1,0:T(1,128)}', space=vmem, size = 0x9000, scoped, tag = 'internal scratch']
  %s0 = inlined_call_operand.vmem [shape: f32[2,8,256], index: 0, kind: input, shape index: {}]
  %s1 = inlined_call_operand.hbm [shape: f32[9,256], index: 1, kind: input, shape index: {}]
  %s2 = inlined_call_operand.vmem [shape: f32[8,1], index: 2, kind: input, shape index: {}]
  %s3 = inlined_call_operand.vmem [shape: f32[8,1], index: 3, kind: input, shape index: {}]
  %s4 = inlined_call_operand.vmem [shape: bf16[32,72], index: 4, kind: input, shape index: {}]
  %s5 = inlined_call_operand.vmem [shape: f32[32,1], index: 5, kind: input, shape index: {}]
  %s6 = inlined_call_operand.hbm [shape: f32[2,40,256], index: 6, kind: output, shape index: {}]
  %s7 = sld [smem:[#allocation0]]
  $region61: #{tpu_custom_call.1} parent=0
    _
  %s9 = ssub.s32 1, %s7
  %s10 = scalar_select 0, %s9, %s7
  $region1: #{tpu_custom_call.1} parent=0
    #allocation2 [shape = 'u8[16384]{0}', space=vmem, size = 0x4000, scoped, tag = 'input window, operand 1, single buffered']
    #allocation3 [shape = 's32[2]{0}', space=sflag, size = 0x8, scoped, tag = 'scoped memory for tpu_custom_call.1']
    #allocation4 [shape = 's32[2]{0}', space=sflag, size = 0x8, scoped, tag = 'scoped memory for tpu_custom_call.1']
    #allocation5 [shape = 'u8[81920]{0}', space=vmem, size = 0x14000, scoped, tag = 'output window, operand 0']
    %11 = vsyncpa [#allocation3], 0
    %12 = vsyncpa [#allocation4], 0
    %s13 = scalar_lea.sflag [#allocation4], 1
    %14 = vsyncpa %s13, 0
    loop: start=0, step=1, limit=4
    $region2: #{tpu_custom_call.1} parent=1 // loop_pre_header
      _
    $region3: #{tpu_custom_call.1} parent=1 // loop_header
      %s16 = sphi 0, %s20
      %p17 = scmp.ge.s32.totalorder %s16, 4
      %s26 = sphi 0, %s28
      %s29 = sphi 0, %s26
      %s30 = sphi 0, %s29
      %s46 = sphi 0, %s30
      %s50 = sphi 0, %s50
      %s52 = sphi 0, %s50
      %s53 = sphi 0, %s52
      %s67 = sphi 0, %s53
      %s71 = sphi 0, %s71
      %s73 = sphi 0, %s71
      %s74 = sphi 0, %s73
      %s88 = sphi 0, %s74
      %s92 = sphi 0, %s92
      %s94 = sphi 0, %s92
      %s95 = sphi 0, %s94
      %s109 = sphi 0, %s95
      %s113 = sphi 0, %s113
      %s115 = sphi 0, %s113
      %s116 = sphi 0, %s115
      %s130 = sphi 0, %s116
      %s134 = sphi 0, %s134
      %s136 = sphi 0, %s134
      %s137 = sphi 0, %s136
      %s151 = sphi 0, %s137
      %s157 = sphi 0, %s159
      %s160 = sphi 0, %s157
      %s161 = sphi 0, %s160
      %s177 = sphi 0, %s161
    $region4: #{tpu_custom_call.1} parent=1 // loop_header_branch
      %19 = sbr.rel (%p17) target = $region8
    $region5: #{tpu_custom_call.1} parent=1 // loop_body
      %s21 = ssub.s32 %s16, 1
      %s22 = ssub.s32 %s16, 2
      %s23 = sadd.s32 %s16, 1
      %s24 = ssub.s32 %s16, %s23
      %p25 = scmp.eq.s32.totalorder %s24, 0
      %s27 = sadd.s32 %s26, 1
      %s28 = scalar_select %p25, %s26, %s27
      %p31 = pneg %p25
      %p32 = scmp.eq.s32.totalorder %s16, 1
      %p33 = por %p31, %p32
      %p34 = scmp.ne.s32.totalorder %s26, %s29
      %p35 = scmp.eq.s32.totalorder %s16, 0
      %p36 = por %p34, %p35
      %p37 = scmp.ne.s32.totalorder %s26, %s29
      %p38 = scmp.eq.s32.totalorder %s21, 1
      %p39 = por %p37, %p38
      %p40 = scmp.ne.s32.totalorder %s29, %s30
      %p41 = scmp.eq.s32.totalorder %s21, 0
      %p42 = por %p40, %p41
      %p43 = scmp.ne.s32.totalorder %s29, %s30
      %p44 = scmp.eq.s32.totalorder %s22, 1
      %p45 = por %p43, %p44
      %p47 = scmp.ne.s32.totalorder %s30, %s46
      %p48 = scmp.eq.s32.totalorder %s22, 0
      %p49 = por %p47, %p48
      %s51 = sadd.s32 %s50, 1
      %p54 = scmp.eq.s32.totalorder %s16, 1
      %p55 = scmp.ne.s32.totalorder %s50, %s52
      %p56 = scmp.eq.s32.totalorder %s16, 0
      %p57 = por %p55, %p56
      %p58 = scmp.ne.s32.totalorder %s50, %s52
      %p59 = scmp.eq.s32.totalorder %s21, 1
      %p60 = por %p58, %p59
      %p61 = scmp.ne.s32.totalorder %s52, %s53
      %p62 = scmp.eq.s32.totalorder %s21, 0
      %p63 = por %p61, %p62
      %p64 = scmp.ne.s32.totalorder %s52, %s53
      %p65 = scmp.eq.s32.totalorder %s22, 1
      %p66 = por %p64, %p65
      %p68 = scmp.ne.s32.totalorder %s53, %s67
      %p69 = scmp.eq.s32.totalorder %s22, 0
      %p70 = por %p68, %p69
      %s72 = sadd.s32 %s71, 1
      %p75 = scmp.eq.s32.totalorder %s16, 1
      %p76 = scmp.ne.s32.totalorder %s71, %s73
      %p77 = scmp.eq.s32.totalorder %s16, 0
      %p78 = por %p76, %p77
      %p79 = scmp.ne.s32.totalorder %s71, %s73
      %p80 = scmp.eq.s32.totalorder %s21, 1
      %p81 = por %p79, %p80
      %p82 = scmp.ne.s32.totalorder %s73, %s74
      %p83 = scmp.eq.s32.totalorder %s21, 0
      %p84 = por %p82, %p83
      %p85 = scmp.ne.s32.totalorder %s73, %s74
      %p86 = scmp.eq.s32.totalorder %s22, 1
      %p87 = por %p85, %p86
      %p89 = scmp.ne.s32.totalorder %s74, %s88
      %p90 = scmp.eq.s32.totalorder %s22, 0
      %p91 = por %p89, %p90
      %s93 = sadd.s32 %s92, 1
      %p96 = scmp.eq.s32.totalorder %s16, 1
      %p97 = scmp.ne.s32.totalorder %s92, %s94
      %p98 = scmp.eq.s32.totalorder %s16, 0
      %p99 = por %p97, %p98
      %p100 = scmp.ne.s32.totalorder %s92, %s94
      %p101 = scmp.eq.s32.totalorder %s21, 1
      %p102 = por %p100, %p101
      %p103 = scmp.ne.s32.totalorder %s94, %s95
      %p104 = scmp.eq.s32.totalorder %s21, 0
      %p105 = por %p103, %p104
      %p106 = scmp.ne.s32.totalorder %s94, %s95
      %p107 = scmp.eq.s32.totalorder %s22, 1
      %p108 = por %p106, %p107
      %p110 = scmp.ne.s32.totalorder %s95, %s109
      %p111 = scmp.eq.s32.totalorder %s22, 0
      %p112 = por %p110, %p111
      %s114 = sadd.s32 %s113, 1
      %p117 = scmp.eq.s32.totalorder %s16, 1
      %p118 = scmp.ne.s32.totalorder %s113, %s115
      %p119 = scmp.eq.s32.totalorder %s16, 0
      %p120 = por %p118, %p119
      %p121 = scmp.ne.s32.totalorder %s113, %s115
      %p122 = scmp.eq.s32.totalorder %s21, 1
      %p123 = por %p121, %p122
      %p124 = scmp.ne.s32.totalorder %s115, %s116
      %p125 = scmp.eq.s32.totalorder %s21, 0
      %p126 = por %p124, %p125
      %p127 = scmp.ne.s32.totalorder %s115, %s116
      %p128 = scmp.eq.s32.totalorder %s22, 1
      %p129 = por %p127, %p128
      %p131 = scmp.ne.s32.totalorder %s116, %s130
      %p132 = scmp.eq.s32.totalorder %s22, 0
      %p133 = por %p131, %p132
      %s135 = sadd.s32 %s134, 1
      %p138 = scmp.eq.s32.totalorder %s16, 1
      %p139 = scmp.ne.s32.totalorder %s134, %s136
      %p140 = scmp.eq.s32.totalorder %s16, 0
      %p141 = por %p139, %p140
      %p142 = scmp.ne.s32.totalorder %s134, %s136
      %p143 = scmp.eq.s32.totalorder %s21, 1
      %p144 = por %p142, %p143
      %p145 = scmp.ne.s32.totalorder %s136, %s137
      %p146 = scmp.eq.s32.totalorder %s21, 0
      %p147 = por %p145, %p146
      %p148 = scmp.ne.s32.totalorder %s136, %s137
      %p149 = scmp.eq.s32.totalorder %s22, 1
      %p150 = por %p148, %p149
      %p152 = scmp.ne.s32.totalorder %s137, %s151
      %p153 = scmp.eq.s32.totalorder %s22, 0
      %p154 = por %p152, %p153
      %s155 = ssub.s32 %s16, %s23
      %p156 = scmp.eq.s32.totalorder %s155, 0
      %s158 = sadd.s32 %s157, 1
      %s159 = scalar_select %p156, %s157, %s158
      %p162 = pneg %p156
      %p163 = scmp.eq.s32.totalorder %s16, 1
      %p164 = por %p162, %p163
      %p165 = scmp.ne.s32.totalorder %s157, %s160
      %p166 = scmp.eq.s32.totalorder %s16, 0
      %p167 = por %p165, %p166
      %p168 = scmp.ne.s32.totalorder %s157, %s160
      %p169 = scmp.eq.s32.totalorder %s21, 1
      %p170 = por %p168, %p169
      %p171 = scmp.ne.s32.totalorder %s160, %s161
      %p172 = scmp.eq.s32.totalorder %s21, 0
      %p173 = por %p171, %p172
      %p174 = scmp.ne.s32.totalorder %s160, %s161
      %p175 = scmp.eq.s32.totalorder %s22, 1
      %p176 = por %p174, %p175
      %p178 = scmp.ne.s32.totalorder %s161, %s177
      %p179 = scmp.eq.s32.totalorder %s22, 0
      %p180 = por %p178, %p179
      %p181 = scmp.le.s32.totalorder 1, %s16
      %p182 = scmp.lt.s32.totalorder %s16, 3
      %p183 = pnand %p181, %p182
      %p184 = pneg %p183
      // Predicated region
      $region9: #{tpu_custom_call.1} parent=5 // pred_check
        _
      $region10: #{tpu_custom_call.1} parent=5 // pred_check_branch
        %186 = sbr.rel (%p183) target = $region12
      $region11: #{tpu_custom_call.1} parent=5 // pred_region
        %s187 = ssub.s32 %s16, 1
        // Predicated region
        $region13: #{tpu_custom_call.1} parent=11 // pred_check
          %p188 = pneg %p63
        $region14: #{tpu_custom_call.1} parent=11 // pred_check_branch
          %190 = sbr.rel (%p188) target = $region16
        $region15: #{tpu_custom_call.1} parent=11 // pred_region
          %192 = vsyncadd [#allocation3], 0
          %s193 = sshll.u32 %s1, 4
          %s194 = int_to_ptr.hbm [resolvable:$true] %s193
          %s195 = sshll.u32 [#allocation2], 4
          %s196 = int_to_ptr.vmem [resolvable:$true] %s195
          %201 = dma.hbm_to_vmem [thread:$0]  %s194, 512, %s196, [#allocation3], 256, 256, 16
        $region16: #{tpu_custom_call.1} parent=11 // pred_fallthru
          _
        // Predicated region
        $region17: #{tpu_custom_call.1} parent=11 // pred_check
          %p202 = pneg %p84
        $region18: #{tpu_custom_call.1} parent=11 // pred_check_branch
          %204 = sbr.rel (%p202) target = $region20
        $region19: #{tpu_custom_call.1} parent=11 // pred_region
          _
        $region20: #{tpu_custom_call.1} parent=11 // pred_fallthru
          _
        // Predicated region
        $region21: #{tpu_custom_call.1} parent=11 // pred_check
          %p205 = pneg %p105
        $region22: #{tpu_custom_call.1} parent=11 // pred_check_branch
          %207 = sbr.rel (%p205) target = $region24
        $region23: #{tpu_custom_call.1} parent=11 // pred_region
          _
        $region24: #{tpu_custom_call.1} parent=11 // pred_fallthru
          _
        // Predicated region
        $region25: #{tpu_custom_call.1} parent=11 // pred_check
          %p208 = pneg %p126
        $region26: #{tpu_custom_call.1} parent=11 // pred_check_branch
          %210 = sbr.rel (%p208) target = $region28
        $region27: #{tpu_custom_call.1} parent=11 // pred_region
          _
        $region28: #{tpu_custom_call.1} parent=11 // pred_fallthru
          _
        // Predicated region
        $region29: #{tpu_custom_call.1} parent=11 // pred_check
          %p211 = pneg %p147
        $region30: #{tpu_custom_call.1} parent=11 // pred_check_branch
          %213 = sbr.rel (%p211) target = $region32
        $region31: #{tpu_custom_call.1} parent=11 // pred_region
          _
        $region32: #{tpu_custom_call.1} parent=11 // pred_fallthru
          _
      $region12: #{tpu_custom_call.1} parent=5 // pred_fallthru
        _
      %p214 = scmp.lt.s32.totalorder %s16, 2
      // Predicated region
      $region33: #{tpu_custom_call.1} parent=5 // pred_check
        %p215 = pneg %p214
      $region34: #{tpu_custom_call.1} parent=5 // pred_check_branch
        %217 = sbr.rel (%p215) target = $region36
      $region35: #{tpu_custom_call.1} parent=5 // pred_region
        // Predicated region
        $region37: #{tpu_custom_call.1} parent=35 // pred_check
          %p218 = pneg %p36
        $region38: #{tpu_custom_call.1} parent=35 // pred_check_branch
          %220 = sbr.rel (%p218) target = $region40
        $region39: #{tpu_custom_call.1} parent=35 // pred_region
          %p221 = scmp.lt.s32.totalorder %s16, 1
          %s222 = scalar_select %p221, %s16, 1
          %s223 = smul.addr %s222, 2
          %s224 = smul.addr %s223, 8
          %s225 = scalar_lea.vmem %s0, %s224
        $region40: #{tpu_custom_call.1} parent=35 // pred_fallthru
          _
      $region36: #{tpu_custom_call.1} parent=5 // pred_fallthru
        _
      %p226 = scmp.le.s32.totalorder 1, %s16
      %p227 = scmp.lt.s32.totalorder %s16, 3
      %p228 = pnand %p226, %p227
      %p229 = pneg %p228
      // Predicated region
      $region41: #{tpu_custom_call.1} parent=5 // pred_check
        _
      $region42: #{tpu_custom_call.1} parent=5 // pred_check_branch
        %231 = sbr.rel (%p228) target = $region44
      $region43: #{tpu_custom_call.1} parent=5 // pred_region
        %s232 = ssub.s32 %s16, 1
        // Predicated region
        $region45: #{tpu_custom_call.1} parent=43 // pred_check
          %p233 = pneg %p63
        $region46: #{tpu_custom_call.1} parent=43 // pred_check_branch
          %235 = sbr.rel (%p233) target = $region48
        $region47: #{tpu_custom_call.1} parent=43 // pred_region
          %237 = dma.done [#allocation3], 512
        $region48: #{tpu_custom_call.1} parent=43 // pred_fallthru
          _
        %p238 = scmp.lt.s32.totalorder %s21, 1
        %s239 = scalar_select %p238, %s21, 1
        %s240 = smul.addr %s239, 2
        %s241 = smul.addr %s240, 8
        %s242 = scalar_lea.vmem %s0, %s241
        %p243 = pneg %p42
        %p244 = pneg %p39
        %p245 = pneg %p63
        %p246 = pneg %p60
        %p247 = pneg %p84
        %p248 = pneg %p81
        %p249 = pneg %p105
        %p250 = pneg %p102
        %p251 = pneg %p126
        %p252 = pneg %p123
        %p253 = pneg %p147
        %p254 = pneg %p144
        %p255 = pneg %p173
        %p256 = pneg %p170
        %s257 = sand.u32 %s160, 1
        %s258 = scalar_lea.sflag [#allocation4], %s257
        %s259 = sand.u32 %s160, 1
        %s260 = smul.addr %s259, 80
        %s261 = scalar_lea.vmem [#allocation5], %s260
        %p262 = scmp.lt.s32.totalorder %s21, 1
        %s263 = scalar_select %p262, %s21, 1
        %s264 = smul.addr %s263, 2
        %s265 = smul.addr %s264, 8
        %s266 = scalar_lea.vmem %s0, %s265
        %v268 = vld [vmem:[%s2] sm:$0xff]
        %v269 = vld [vmem:[%s3] sm:$0xff]
        %v270 = vld [vmem:[#allocation2] sm:$0xff]
        %v271 = vld [vmem:[#allocation2 + $0x8] sm:$0xff]
        %v272 = vld [vmem:[#allocation2 + $0x10] sm:$0x1]
        %v273 = vld [vmem:[#allocation2 + $0x18] sm:$0x1]
        %v274 = vld [vmem:[%s4] sm:$0xf]
        %v275 = vld [vmem:[%s4 + $0x4] sm:$0xf]
        %v276 = vld [vmem:[%s4 + $0x8] sm:$0xf]
        %v277 = vld [vmem:[%s4 + $0xc] sm:$0xf]
        %v278 = vld [vmem:[%s266] sm:$0xff]
        %v279 = vld [vmem:[%s266 + $0x8] sm:$0xff]
        %281 = vset.pattern.permute.xlu0 0
        %282 = vperm.xlu0 %281, %v268
        %v283 = vpop.permute.xlu0 %282
        %v285 = vmul.f32 %v278, %v283
        %v286 = vmul.f32 %v279, %v283
        %288 = vset.pattern.permute.xlu0 0
        %289 = vperm.xlu0 %288, %v269
        %v290 = vpop.permute.xlu0 %289
        %v292 = vadd.f32 %v285, %v290
        %v293 = vadd.f32 %v286, %v290
        %v294 = vmax.f32 %v292, 0.0
        %v295 = vmax.f32 %v293, 0.0
        %296 = vrot.lane.b32.xlu0 %v294, 17
        %v297 = vpop.permute.xlu0 %296
        %298 = vrot.lane.b32.xlu0 %v295, 17
        %v299 = vpop.permute.xlu0 %298
        %v300 = vlaneseq
        %v301 = vand.u32 %v300, 127
        %vm302 = vcmp.lt.s32.totalorder %v301, 17
        %v303 = vsel %vm302, %v297, %v299
        %v304 = vsel %vm302, %v299, %v297
        %305 = vrot.lane.b32.xlu0 %v294, 16
        %v306 = vpop.permute.xlu0 %305
        %307 = vrot.lane.b32.xlu0 %v295, 16
        %v308 = vpop.permute.xlu0 %307
        %vm309 = vcmp.lt.s32.totalorder %v301, 16
        %v310 = vsel %vm309, %v306, %v308
        %v311 = vsel %vm309, %v308, %v306
        %312 = vrot.lane.b32.xlu0 %v294, 15
        %v313 = vpop.permute.xlu0 %312
        %314 = vrot.lane.b32.xlu0 %v295, 15
        %v315 = vpop.permute.xlu0 %314
        %vm316 = vcmp.lt.s32.totalorder %v301, 15
        %v317 = vsel %vm316, %v313, %v315
        %v318 = vsel %vm316, %v315, %v313
        %319 = vrot.lane.b32.xlu0 %v294, 1
        %v320 = vpop.permute.xlu0 %319
        %321 = vrot.lane.b32.xlu0 %v295, 1
        %v322 = vpop.permute.xlu0 %321
        %vm323 = vcmp.lt.s32.totalorder %v301, 1
        %v324 = vsel %vm323, %v320, %v322
        %v325 = vsel %vm323, %v322, %v320
        %326 = vrot.lane.b32.xlu0 %v294, 127
        %v327 = vpop.permute.xlu0 %326
        %328 = vrot.lane.b32.xlu0 %v295, 127
        %v329 = vpop.permute.xlu0 %328
        %vm330 = vcmp.lt.s32.totalorder %v301, 127
        %v331 = vsel %vm330, %v327, %v329
        %v332 = vsel %vm330, %v329, %v327
        %333 = vrot.lane.b32.xlu0 %v294, 113
        %v334 = vpop.permute.xlu0 %333
        %335 = vrot.lane.b32.xlu0 %v295, 113
        %v336 = vpop.permute.xlu0 %335
        %vm337 = vcmp.lt.s32.totalorder %v301, 113
        %v338 = vsel %vm337, %v334, %v336
        %v339 = vsel %vm337, %v336, %v334
        %340 = vrot.lane.b32.xlu0 %v294, 112
        %v341 = vpop.permute.xlu0 %340
        %342 = vrot.lane.b32.xlu0 %v295, 112
        %v343 = vpop.permute.xlu0 %342
        %vm344 = vcmp.lt.s32.totalorder %v301, 112
        %v345 = vsel %vm344, %v341, %v343
        %v346 = vsel %vm344, %v343, %v341
        %347 = vrot.lane.b32.xlu0 %v294, 111
        %v348 = vpop.permute.xlu0 %347
        %349 = vrot.lane.b32.xlu0 %v295, 111
        %v350 = vpop.permute.xlu0 %349
        %vm351 = vcmp.lt.s32.totalorder %v301, 111
        %v352 = vsel %vm351, %v348, %v350
        %v353 = vsel %vm351, %v350, %v348
        %v354 = vperm.slane %v270, 0
        %v355 = vperm.slane %v271, 0
        %v356 = vmul.f32 %v304, %v354
        %v357 = vmul.f32 %v303, %v355
        %v358 = vperm.slane %v270, 1
        %v359 = vperm.slane %v271, 1
        %v360 = vmul.f32 %v311, %v358
        %v361 = vmul.f32 %v310, %v359
        %v362 = vperm.slane %v270, 2
        %v363 = vperm.slane %v271, 2
        %v364 = vmul.f32 %v318, %v362
        %v365 = vmul.f32 %v317, %v363
        %v366 = vperm.slane %v270, 3
        %v367 = vperm.slane %v271, 3
        %v368 = vmul.f32 %v325, %v366
        %v369 = vmul.f32 %v324, %v367
        %v370 = vperm.slane %v270, 4
        %v371 = vperm.slane %v271, 4
        %v372 = vmul.f32 %v294, %v370
        %v373 = vmul.f32 %v295, %v371
        %v374 = vperm.slane %v270, 5
        %v375 = vperm.slane %v271, 5
        %v376 = vmul.f32 %v331, %v374
        %v377 = vmul.f32 %v332, %v375
        %v378 = vperm.slane %v270, 6
        %v379 = vperm.slane %v271, 6
        %v380 = vmul.f32 %v338, %v378
        %v381 = vmul.f32 %v339, %v379
        %v382 = vperm.slane %v270, 7
        %v383 = vperm.slane %v271, 7
        %v384 = vmul.f32 %v345, %v382
        %v385 = vmul.f32 %v346, %v383
        %v386 = vperm.slane %v272, 0
        %v387 = vperm.slane %v273, 0
        %v388 = vmul.f32 %v352, %v386
        %v389 = vmul.f32 %v353, %v387
        %v390 = vpack.c.bf16 %v360, %v356
        %v391 = vpack.c.bf16 %v361, %v357
        %v392 = vpack.c.bf16 %v368, %v364
        %v393 = vpack.c.bf16 %v369, %v365
        %v394 = vpack.c.bf16 %v376, %v372
        %v395 = vpack.c.bf16 %v377, %v373
        %v396 = vpack.c.bf16 %v384, %v380
        %v397 = vpack.c.bf16 %v385, %v381
        %v398 = vpack.c.bf16 %v388, %v388
        %v399 = vpack.c.bf16 %v389, %v389
        %v404 = vunpack.c.l.b16 %v274
        %v405 = vunpack.c.l.b16 %v275
        %v406 = vunpack.c.l.b16 %v276
        %v407 = vunpack.c.l.b16 %v277
        %v408 = vpack.c.b16 %v405, %v404
        %v409 = vpack.c.b16 %v407, %v406
        %vm410 = vcmask 588800
        %v412 = vsel %vm410, %v408, 0
        %v415 = vsel %vm410, %v409, 0
        %vm417 = vcmask 1043456
        %v419 = vsel %vm417, %v398, 0
        %v422 = vsel %vm417, %v399, 0
        %424 = vmatpush.bf16.msra.mxu0 0
        %425 = vmatpush.bf16.msra.mxu0 0
        %426 = vmatpush.bf16.msra.mxu0 0
        %427 = vmatpush.bf16.msra.mxu0 %v419
        %428 = vmatpush.bf16.msra.mxu0 %v396
        %429 = vmatpush.bf16.msra.mxu0 %v394
        %430 = vmatpush.bf16.msra.mxu0 %v392
        %431 = vmatpush.bf16.msra.mxu0 %v390
        %432 = vmatmul.bf16.gmra.mxu0 %v412
        %v433 = vpop.f32.mrf.mxu0
        %v434 = vadd.f32 0.0, %v433
        %v435 = vpop.f32.mrf.mxu0
        %v436 = vadd.f32 0.0, %v435
        %437 = vmatmul.bf16.gmra.mxu0 %v415
        %v438 = vpop.f32.mrf.mxu0
        %v439 = vadd.f32 0.0, %v438
        %v440 = vpop.f32.mrf.mxu0
        %v441 = vadd.f32 0.0, %v440
        %442 = vdwg.mxu0
        %443 = vmatpush.bf16.msra.mxu0 0
        %444 = vmatpush.bf16.msra.mxu0 0
        %445 = vmatpush.bf16.msra.mxu0 0
        %446 = vmatpush.bf16.msra.mxu0 %v422
        %447 = vmatpush.bf16.msra.mxu0 %v397
        %448 = vmatpush.bf16.msra.mxu0 %v395
        %449 = vmatpush.bf16.msra.mxu0 %v393
        %450 = vmatpush.bf16.msra.mxu0 %v391
        %451 = vmatmul.bf16.gmra.mxu0 %v412
        %v452 = vpop.f32.mrf.mxu0
        %v453 = vadd.f32 0.0, %v452
        %v454 = vpop.f32.mrf.mxu0
        %v455 = vadd.f32 0.0, %v454
        %456 = vmatmul.bf16.gmra.mxu0 %v415
        %v457 = vpop.f32.mrf.mxu0
        %v458 = vadd.f32 0.0, %v457
        %v459 = vpop.f32.mrf.mxu0
        %v460 = vadd.f32 0.0, %v459
        %461 = vdwg.mxu0
        %462 = vst [vmem:[%s261] sm:$0xff] %v278
        %463 = vst [vmem:[%s261 + $0x8] sm:$0xff] %v279
        %464 = vst [vmem:[%s261 + $0x10] sm:$0xff] %v434
        %465 = vst [vmem:[%s261 + $0x18] sm:$0xff] %v453
        %466 = vst [vmem:[%s261 + $0x20] sm:$0xff] %v436
        %467 = vst [vmem:[%s261 + $0x28] sm:$0xff] %v455
        %468 = vst [vmem:[%s261 + $0x30] sm:$0xff] %v439
        %469 = vst [vmem:[%s261 + $0x38] sm:$0xff] %v458
        %470 = vst [vmem:[%s261 + $0x40] sm:$0xff] %v441
        %471 = vst [vmem:[%s261 + $0x48] sm:$0xff] %v460
        %s472 = sand.u32 %s160, 1
        %s473 = scalar_lea.sflag [#allocation4], %s472
        %s474 = sand.u32 %s160, 1
        %s475 = smul.addr %s474, 80
        %s476 = scalar_lea.vmem [#allocation5], %s475
        // Predicated region
        $region49: #{tpu_custom_call.1} parent=43 // pred_check
          %p477 = pneg %p170
        $region50: #{tpu_custom_call.1} parent=43 // pred_check_branch
          %479 = sbr.rel (%p477) target = $region52
        $region51: #{tpu_custom_call.1} parent=43 // pred_region
          %481 = vsyncadd %s473, 0
          %s482 = smul.addr %s21, 10
          %s483 = smul.addr %s482, 8
          %s484 = scalar_lea.hbm %s6, %s483
          %s485 = sshll.u32 %s476, 4
          %s486 = int_to_ptr.vmem [resolvable:$true] %s485
          %s487 = sshll.u32 %s484, 4
          %s488 = int_to_ptr.hbm [resolvable:$true] %s487
          %493 = dma.vmem_to_hbm [thread:$0]  %s486, 1280, %s488, %s473, 256, 256, 16
        $region52: #{tpu_custom_call.1} parent=43 // pred_fallthru
          _
      $region44: #{tpu_custom_call.1} parent=5 // pred_fallthru
        _
      %p494 = scmp.le.s32.totalorder 2, %s16
      // Predicated region
      $region53: #{tpu_custom_call.1} parent=5 // pred_check
        %p495 = pneg %p494
      $region54: #{tpu_custom_call.1} parent=5 // pred_check_branch
        %497 = sbr.rel (%p495) target = $region56
      $region55: #{tpu_custom_call.1} parent=5 // pred_region
        %s498 = ssub.s32 %s16, 2
        // Predicated region
        $region57: #{tpu_custom_call.1} parent=55 // pred_check
          %p499 = pneg %p176
        $region58: #{tpu_custom_call.1} parent=55 // pred_check_branch
          %501 = sbr.rel (%p499) target = $region60
        $region59: #{tpu_custom_call.1} parent=55 // pred_region
          %s502 = sand.u32 %s161, 1
          %s503 = scalar_lea.sflag [#allocation4], %s502
          %s504 = sand.u32 %s161, 1
          %s505 = smul.addr %s504, 80
          %s506 = scalar_lea.vmem [#allocation5], %s505
          %508 = dma.done %s503, 1280
        $region60: #{tpu_custom_call.1} parent=55 // pred_fallthru
          _
      $region56: #{tpu_custom_call.1} parent=5 // pred_fallthru
        _
    $region6: #{tpu_custom_call.1} parent=1 // loop_footer
      %s20 = sadd.s32 1, %s16
    $region7: #{tpu_custom_call.1} parent=1 // loop_footer_branch
      %15 = sbr.rel target = $region3
    $region8: #{tpu_custom_call.1} parent=1 // loop_exit
      _
    %509 = vsyncpa [#allocation3], 1
    %s510 = scalar_lea.sflag [#allocation3], 1
    %511 = vsyncpa %s510, 1
    %512 = vsyncpa [#allocation4], 1
    %s513 = scalar_lea.sflag [#allocation4], 1
    %514 = vsyncpa %s513, 1

</llo_original>
